<compile_context>
chip_gen: v5e
topology: v5e:2x2
jax: 0.10.0
libtpu: 0.0.40
codegen_flags: <defaults>
</compile_context>

<pallas_src>
import functools

import jax
import jax.numpy as jnp
from jax import lax
from jax.experimental import pallas as pl
from jax.experimental.pallas import tpu as pltpu


def _hier_ce_kernel(lp_ref, anc_ref, cov_ref, lbl_ref, out_ref,
                    p_acc, mh_acc, numer_acc, denom_acc,
                    *, use_cov_weight: bool):
    # lp_ref:  [tm, tk] f32   leaf probabilities tile
    # anc_ref: [tk, tn] bf16  ancestors (0/1) tile
    # cov_ref: [1,  tn] f32   coverage tile
    # lbl_ref: [tm, 1 ] i32   leaf labels for this batch tile
    # out_ref: [tm, 1 ] f32   per-sample loss (written on last (nj, lk))
    # scratch: p_acc/mh_acc [tm, tn] f32, numer_acc/denom_acc [tm, 1] f32
    nj = pl.program_id(1)
    lk = pl.program_id(2)
    n_nj = pl.num_programs(1)
    n_lk = pl.num_programs(2)
    tm, tk = lp_ref.shape

    # ---- init per-sample accumulators at the start of each batch tile ----
    @pl.when((nj == 0) & (lk == 0))
    def _():
        numer_acc[...] = jnp.zeros_like(numer_acc)
        denom_acc[...] = jnp.zeros_like(denom_acc)

    # ---- init per-(batch,node)-tile matmul accumulators at lk == 0 ----
    @pl.when(lk == 0)
    def _():
        p_acc[...] = jnp.zeros_like(p_acc)
        mh_acc[...] = jnp.zeros_like(mh_acc)

    anc = anc_ref[...].astype(jnp.float32)        # 0/1 bf16 -> exact f32
    lp = lp_ref[...]

    # all_nodes_probs tile: leaf_probs @ ancestors_mat (MXU, f32 accumulate)
    p_acc[...] += jnp.dot(lp, anc, preferred_element_type=jnp.float32)

    # labels_multihot tile rebuilt in-kernel: onehot(labels) @ ancestors_mat,
    # re-using the ancestors tile already in VMEM (no [B, N] HBM array).
    lbl = lbl_ref[...]                            # [tm, 1] int32
    col = lax.broadcasted_iota(jnp.int32, (tm, tk), 1) + lk * tk
    onehot = (col == lbl).astype(jnp.float32)     # [tm, tk]
    mh_acc[...] += jnp.dot(onehot, anc, preferred_element_type=jnp.float32)

    # ---- after the last L tile: masked weighted reduction over this N tile ----
    @pl.when(lk == n_lk - 1)
    def _():
        p = p_acc[...]
        mh = mh_acc[...]
        mask = mh > 0.5
        # Guarded log: masked-out / padded lanes never see log(0) -> no NaN.
        logp = jnp.log(jnp.where(mask, p, 1.0))
        if use_cov_weight:
            wc = mh * cov_ref[...]                                  # [tm, tn]
            numer_acc[...] += jnp.sum(wc * logp, axis=1, keepdims=True)
            denom_acc[...] += jnp.sum(wc, axis=1, keepdims=True)
        else:
            numer_acc[...] += jnp.sum(mh * logp, axis=1, keepdims=True)

    # ---- after the last (N, L) tiles: finalize per-sample loss ----
    @pl.when((lk == n_lk - 1) & (nj == n_nj - 1))
    def _():
        if use_cov_weight:
            d = denom_acc[...]
            inv = pl.reciprocal(jnp.where(d > 0.0, d, 1.0), approx=False)
            out_ref[...] = -numer_acc[...] * inv
        else:
            out_ref[...] = -numer_acc[...]


def _round_up(x, m):
    return (x + m - 1) // m * m


def hier_ce(leaf_probs, labels, ancestors_mat, cov_vec, *, cov_weight=False,
            tm=None, tn=None, tk=None):
    """Pallas implementation of HierCE.forward.

    leaf_probs:    [B, L] float32, rows sum to 1 over leaves
    labels:        [B]    int leaf indices
    ancestors_mat: [L, N] float 0/1 (transpose of desc_matrix)
    cov_vec:       [1, N] float32 (transpose of coverage_vec)
    returns scalar float32 loss (mean over batch).
    """
    B, L = leaf_probs.shape
    L2, N = ancestors_mat.shape
    assert L == L2
    assert cov_vec.shape == (1, N)

    # Tile sizes: sublane-/lane-aligned, capped so double-buffered tiles stay
    # tiny relative to VMEM on every generation (v5e/v6e 128 MiB, v7x 64 MiB).
    tm = min(128, _round_up(B, 8)) if tm is None else tm
    tk = min(512, _round_up(L, 128)) if tk is None else tk
    tn = min(512, _round_up(N, 128)) if tn is None else tn

    B_pad = _round_up(B, tm)
    L_pad = _round_up(L, tk)
    N_pad = _round_up(N, tn)

    # Pad inputs. Padded batch rows get a one-hot leaf distribution (prob 1 at
    # leaf 0) so they produce finite, ignored losses; padded nodes/leaves are 0.
    lp = jnp.pad(leaf_probs.astype(jnp.float32),
                 ((0, B_pad - B), (0, L_pad - L)))
    lp = lp.at[B:, 0].set(1.0)
    anc = jnp.pad(ancestors_mat, ((0, L_pad - L), (0, N_pad - N)))
    anc = anc.astype(jnp.bfloat16)                       # 0/1 -> lossless bf16
    cov = jnp.pad(cov_vec.astype(jnp.float32), ((0, 0), (0, N_pad - N)))
    lbl = jnp.pad(labels.astype(jnp.int32), (0, B_pad - B)).reshape(B_pad, 1)

    grid = (B_pad // tm, N_pad // tn, L_pad // tk)
    kernel = functools.partial(_hier_ce_kernel, use_cov_weight=cov_weight)

    out = pl.pallas_call(
        kernel,
        out_shape=jax.ShapeDtypeStruct((B_pad, 1), jnp.float32),
        grid_spec=pltpu.PrefetchScalarGridSpec(
            num_scalar_prefetch=0,
            grid=grid,
            in_specs=[
                pl.BlockSpec((tm, tk), lambda bi, nj, lk: (bi, lk)),  # leaf_probs
                pl.BlockSpec((tk, tn), lambda bi, nj, lk: (lk, nj)),  # ancestors
                pl.BlockSpec((1, tn), lambda bi, nj, lk: (0, nj)),    # coverage
                pl.BlockSpec((tm, 1), lambda bi, nj, lk: (bi, 0)),    # labels
            ],
            out_specs=pl.BlockSpec((tm, 1), lambda bi, nj, lk: (bi, 0)),
            scratch_shapes=[
                pltpu.VMEM((tm, tn), jnp.float32),   # p_acc   (probs matmul)
                pltpu.VMEM((tm, tn), jnp.float32),   # mh_acc  (labels multihot)
                pltpu.VMEM((tm, 1), jnp.float32),    # numerator
                pltpu.VMEM((tm, 1), jnp.float32),    # denominator (cov_weight)
            ],
        ),
        compiler_params=pltpu.CompilerParams(
            dimension_semantics=("parallel", "arbitrary", "arbitrary"),
            vmem_limit_bytes=64 * 1024 * 1024,
        ),
    )(lp, anc, cov, lbl)

    per_sample = out[:B, 0]
    return jnp.mean(per_sample)


def _hier_ce_ref(leaf_probs, labels, ancestors_mat, cov_vec, *, cov_weight=False):
    """Pure-JAX reference mirroring the PyTorch module."""
    labels_multihot = jnp.take(ancestors_mat, labels, axis=0)
    all_nodes_probs = leaf_probs @ ancestors_mat
    log_probs = jnp.log(all_nodes_probs)
    if cov_weight:
        w = labels_multihot * cov_vec
        w = w / jnp.sum(w, axis=1, keepdims=True)
    else:
        w = jnp.ones_like(labels_multihot)
    loss_per_sample = -jnp.sum(labels_multihot * log_probs * w, axis=1)
    return jnp.mean(loss_per_sample)


def _build_hierarchy(num_leaves):
    """Deterministic synthetic hierarchy.

    Nodes = leaves [0, L) + parents [L, L + L//2) + root (last).
    ancestors_mat = desc_matrix.T has shape [L, N]; coverage_vec[n] = number of
    leaf descendants of node n.
    """
    L = num_leaves
    P = L // 2
    N = L + P + 1
    desc = jnp.zeros((N, L), dtype=jnp.float32)
    desc = desc.at[jnp.arange(L), jnp.arange(L)].set(1.0)           # leaves
    parent_rows = L + jnp.arange(L) // 2
    desc = desc.at[parent_rows, jnp.arange(L)].set(1.0)             # parents
    desc = desc.at[N - 1, :].set(1.0)                               # root

    ancestors_mat = desc.T                                          # [L, N]
    cov_vec = jnp.sum(desc, axis=1, keepdims=True).T                # [1, N]
    return ancestors_mat, cov_vec


if __name__ == "__main__":
    key = jax.random.PRNGKey(0)

    # Test 1: small shapes (single-tile grid, exercises padding of L/N).
    # Test 2: larger shapes with small forced tiles (multi-tile grid on every
    #         axis, exercises the cross-tile accumulation paths).
    configs = [
        dict(B=8, L=32, tiles={}),
        dict(B=16, L=160, tiles=dict(tm=8, tn=128, tk=128)),
    ]

    for cfg in configs:
        B, L = cfg["B"], cfg["L"]
        ancestors_mat, cov_vec = _build_hierarchy(L)
        key, k1, k2 = jax.random.split(key, 3)
        logits = jax.random.normal(k1, (B, L), dtype=jnp.float32)
        leaf_probs = jax.nn.softmax(logits, axis=-1)
        labels = jax.random.randint(k2, (B,), 0, L, dtype=jnp.int32)

        for use_cov in (False, True):
            loss = hier_ce(leaf_probs, labels, ancestors_mat, cov_vec,
                           cov_weight=use_cov, **cfg["tiles"])
            loss = jax.block_until_ready(loss)
            ref = _hier_ce_ref(leaf_probs, labels, ancestors_mat, cov_vec,
                               cov_weight=use_cov)
            assert jnp.allclose(loss, ref, rtol=1e-5, atol=1e-5), \
                (cfg, use_cov, loss, ref)

    print("KERNEL_OK")
</pallas_src>

<mosaic_0001>
module attributes {stable_mosaic.version = 11 : i64} {
  func.func @_hier_ce_kernel(%arg0: i32, %arg1: i32, %arg2: i32, %arg3: memref<8x128xf32, #tpu.memory_space<vmem>>, %arg4: memref<128x128xbf16, #tpu.memory_space<vmem>>, %arg5: memref<1x128xf32, #tpu.memory_space<vmem>>, %arg6: memref<8x1xi32, #tpu.memory_space<vmem>>, %arg7: memref<8x1xf32, #tpu.memory_space<vmem>>, %arg8: memref<8x128xf32, #tpu.memory_space<vmem>>, %arg9: memref<8x128xf32, #tpu.memory_space<vmem>>, %arg10: memref<8x1xf32, #tpu.memory_space<vmem>>, %arg11: memref<8x1xf32, #tpu.memory_space<vmem>>) attributes {dimension_semantics = [#tpu.dimension_semantics<parallel>, #tpu.dimension_semantics<arbitrary>, #tpu.dimension_semantics<arbitrary>], iteration_bounds = array<i64: 1, 1, 1>, scalar_prefetch = 0 : i64, scratch_operands = 4 : i64, tpu.core_type = #tpu.core_type<tc>, window_params = [{transform_indices = @transform_0, window_bounds = array<i64: 8, 128>}, {transform_indices = @transform_1, window_bounds = array<i64: 128, 128>}, {transform_indices = @transform_2, window_bounds = array<i64: 1, 128>}, {transform_indices = @transform_3, window_bounds = array<i64: 8, 1>}, {transform_indices = @transform_4, window_bounds = array<i64: 8, 1>}]} {
    %c0_i32 = arith.constant 0 : i32
    %0 = arith.cmpi eq, %arg1, %c0_i32 : i32
    %c0_i32_0 = arith.constant 0 : i32
    %1 = arith.cmpi eq, %arg2, %c0_i32_0 : i32
    %2 = arith.andi %0, %1 : i1
    %3 = arith.extui %2 : i1 to i32
    %c0_i32_1 = arith.constant 0 : i32
    %4 = arith.cmpi ne, %3, %c0_i32_1 : i32
    scf.if %4 {
      %cst_23 = arith.constant 0.000000e+00 : f32
      %36 = vector.broadcast %cst_23 : f32 to vector<8x1xf32>
      %c0_24 = arith.constant 0 : index
      %c0_25 = arith.constant 0 : index
      %37 = vector.load %arg10[%c0_24, %c0_25] : memref<8x1xf32, #tpu.memory_space<vmem>>, vector<8x1xf32>
      tpu.vector_store %arg10[%c0_24, %c0_25], %36 {strides = array<i32>} : memref<8x1xf32, #tpu.memory_space<vmem>>, vector<8x1xf32>,
      %cst_26 = arith.constant 0.000000e+00 : f32
      %38 = vector.broadcast %cst_26 : f32 to vector<8x1xf32>
      %c0_27 = arith.constant 0 : index
      %c0_28 = arith.constant 0 : index
      %39 = vector.load %arg11[%c0_27, %c0_28] : memref<8x1xf32, #tpu.memory_space<vmem>>, vector<8x1xf32>
      tpu.vector_store %arg11[%c0_27, %c0_28], %38 {strides = array<i32>} : memref<8x1xf32, #tpu.memory_space<vmem>>, vector<8x1xf32>,
    } else {
    }
    %c0_i32_2 = arith.constant 0 : i32
    %5 = arith.cmpi eq, %arg2, %c0_i32_2 : i32
    %6 = arith.extui %5 : i1 to i32
    %c0_i32_3 = arith.constant 0 : i32
    %7 = arith.cmpi ne, %6, %c0_i32_3 : i32
    scf.if %7 {
      %cst_23 = arith.constant 0.000000e+00 : f32
      %36 = vector.broadcast %cst_23 : f32 to vector<8x128xf32>
      %c0_24 = arith.constant 0 : index
      %c0_25 = arith.constant 0 : index
      %37 = vector.load %arg8[%c0_24, %c0_25] : memref<8x128xf32, #tpu.memory_space<vmem>>, vector<8x128xf32>
      tpu.vector_store %arg8[%c0_24, %c0_25], %36 {strides = array<i32>} : memref<8x128xf32, #tpu.memory_space<vmem>>, vector<8x128xf32>,
      %cst_26 = arith.constant 0.000000e+00 : f32
      %38 = vector.broadcast %cst_26 : f32 to vector<8x128xf32>
      %c0_27 = arith.constant 0 : index
      %c0_28 = arith.constant 0 : index
      %39 = vector.load %arg9[%c0_27, %c0_28] : memref<8x128xf32, #tpu.memory_space<vmem>>, vector<8x128xf32>
      tpu.vector_store %arg9[%c0_27, %c0_28], %38 {strides = array<i32>} : memref<8x128xf32, #tpu.memory_space<vmem>>, vector<8x128xf32>,
    } else {
    }
    %c0 = arith.constant 0 : index
    %c0_4 = arith.constant 0 : index
    %8 = vector.load %arg4[%c0, %c0_4] : memref<128x128xbf16, #tpu.memory_space<vmem>>, vector<128x128xbf16>
    %9 = arith.extf %8 : vector<128x128xbf16> to vector<128x128xf32>
    %c0_5 = arith.constant 0 : index
    %c0_6 = arith.constant 0 : index
    %10 = vector.load %arg3[%c0_5, %c0_6] : memref<8x128xf32, #tpu.memory_space<vmem>>, vector<8x128xf32>
    %c0_7 = arith.constant 0 : index
    %c0_8 = arith.constant 0 : index
    %11 = vector.load %arg8[%c0_7, %c0_8] : memref<8x128xf32, #tpu.memory_space<vmem>>, vector<8x128xf32>
    %cst = arith.constant dense<0.000000e+00> : vector<8x128xf32>
    %12 = tpu.matmul %10, %9, %cst {dimension_numbers = #tpu.dot_dimension_numbers<[1], [0], [0], [1], [0, 0, 1, 1], [], []>} : vector<8x128xf32>, vector<128x128xf32>, vector<8x128xf32> -> vector<8x128xf32>
    %13 = arith.addf %11, %12 : vector<8x128xf32>
    %c0_9 = arith.constant 0 : index
    %c0_10 = arith.constant 0 : index
    %14 = vector.load %arg8[%c0_9, %c0_10] : memref<8x128xf32, #tpu.memory_space<vmem>>, vector<8x128xf32>
    tpu.vector_store %arg8[%c0_9, %c0_10], %13 {strides = array<i32>} : memref<8x128xf32, #tpu.memory_space<vmem>>, vector<8x128xf32>,
    %c0_11 = arith.constant 0 : index
    %c0_12 = arith.constant 0 : index
    %15 = vector.load %arg6[%c0_11, %c0_12] : memref<8x1xi32, #tpu.memory_space<vmem>>, vector<8x1xi32>
    %16 = tpu.iota {dimensions = array<i32: 1>} : vector<8x128xi32>
    %c128_i32 = arith.constant 128 : i32
    %17 = arith.muli %arg2, %c128_i32 : i32
    %18 = vector.broadcast %17 : i32 to vector<8x128xi32>
    %19 = arith.addi %16, %18 : vector<8x128xi32>
    %20 = vector.broadcast %15 : vector<8x1xi32> to vector<8x128xi32>
    %21 = arith.cmpi eq, %19, %20 : vector<8x128xi32>
    %22 = arith.extui %21 : vector<8x128xi1> to vector<8x128xi32>
    %23 = arith.sitofp %22 : vector<8x128xi32> to vector<8x128xf32>
    %c0_13 = arith.constant 0 : index
    %c0_14 = arith.constant 0 : index
    %24 = vector.load %arg9[%c0_13, %c0_14] : memref<8x128xf32, #tpu.memory_space<vmem>>, vector<8x128xf32>
    %cst_15 = arith.constant dense<0.000000e+00> : vector<8x128xf32>
    %25 = tpu.matmul %23, %9, %cst_15 {dimension_numbers = #tpu.dot_dimension_numbers<[1], [0], [0], [1], [0, 0, 1, 1], [], []>} : vector<8x128xf32>, vector<128x128xf32>, vector<8x128xf32> -> vector<8x128xf32>
    %26 = arith.addf %24, %25 : vector<8x128xf32>
    %c0_16 = arith.constant 0 : index
    %c0_17 = arith.constant 0 : index
    %27 = vector.load %arg9[%c0_16, %c0_17] : memref<8x128xf32, #tpu.memory_space<vmem>>, vector<8x128xf32>
    tpu.vector_store %arg9[%c0_16, %c0_17], %26 {strides = array<i32>} : memref<8x128xf32, #tpu.memory_space<vmem>>, vector<8x128xf32>,
    %c0_i32_18 = arith.constant 0 : i32
    %28 = arith.cmpi eq, %arg2, %c0_i32_18 : i32
    %29 = arith.extui %28 : i1 to i32
    %c0_i32_19 = arith.constant 0 : i32
    %30 = arith.cmpi ne, %29, %c0_i32_19 : i32
    scf.if %30 {
      %c0_23 = arith.constant 0 : index
      %c0_24 = arith.constant 0 : index
      %36 = vector.load %arg8[%c0_23, %c0_24] : memref<8x128xf32, #tpu.memory_space<vmem>>, vector<8x128xf32>
      %c0_25 = arith.constant 0 : index
      %c0_26 = arith.constant 0 : index
      %37 = vector.load %arg9[%c0_25, %c0_26] : memref<8x128xf32, #tpu.memory_space<vmem>>, vector<8x128xf32>
      %cst_27 = arith.constant 5.000000e-01 : f32
      %38 = vector.broadcast %cst_27 : f32 to vector<8x128xf32>
      %39 = arith.cmpf ogt, %37, %38 : vector<8x128xf32>
      %cst_28 = arith.constant 1.000000e+00 : f32
      %40 = vector.broadcast %cst_28 : f32 to vector<8x128xf32>
      %41 = arith.select %39, %36, %40 : vector<8x128xi1>, vector<8x128xf32>
      %42 = math.log %41 : vector<8x128xf32>
      %c0_29 = arith.constant 0 : index
      %c0_30 = arith.constant 0 : index
      %43 = vector.load %arg10[%c0_29, %c0_30] : memref<8x1xf32, #tpu.memory_space<vmem>>, vector<8x1xf32>
      %44 = arith.mulf %37, %42 : vector<8x128xf32>
      %cst_31 = arith.constant dense<0.000000e+00> : vector<8xf32>
      %45 = vector.multi_reduction <add>, %44, %cst_31 [1] : vector<8x128xf32> to vector<8xf32>
      %46 = vector.shape_cast %45 : vector<8xf32> to vector<8x1xf32>
      %47 = arith.addf %43, %46 : vector<8x1xf32>
      %c0_32 = arith.constant 0 : index
      %c0_33 = arith.constant 0 : index
      %48 = vector.load %arg10[%c0_32, %c0_33] : memref<8x1xf32, #tpu.memory_space<vmem>>, vector<8x1xf32>
      tpu.vector_store %arg10[%c0_32, %c0_33], %47 {strides = array<i32>} : memref<8x1xf32, #tpu.memory_space<vmem>>, vector<8x1xf32>,
    } else {
    }
    %c0_i32_20 = arith.constant 0 : i32
    %31 = arith.cmpi eq, %arg2, %c0_i32_20 : i32
    %c0_i32_21 = arith.constant 0 : i32
    %32 = arith.cmpi eq, %arg1, %c0_i32_21 : i32
    %33 = arith.andi %31, %32 : i1
    %34 = arith.extui %33 : i1 to i32
    %c0_i32_22 = arith.constant 0 : i32
    %35 = arith.cmpi ne, %34, %c0_i32_22 : i32
    scf.if %35 {
      %c0_23 = arith.constant 0 : index
      %c0_24 = arith.constant 0 : index
      %36 = vector.load %arg10[%c0_23, %c0_24] : memref<8x1xf32, #tpu.memory_space<vmem>>, vector<8x1xf32>
      %cst_25 = arith.constant 0.000000e+00 : f32
      %37 = vector.broadcast %cst_25 : f32 to vector<8x1xf32>
      %38 = arith.subf %37, %36 : vector<8x1xf32>
      %c0_26 = arith.constant 0 : index
      %c0_27 = arith.constant 0 : index
      %39 = vector.load %arg7[%c0_26, %c0_27] : memref<8x1xf32, #tpu.memory_space<vmem>>, vector<8x1xf32>
      tpu.vector_store %arg7[%c0_26, %c0_27], %38 {strides = array<i32>} : memref<8x1xf32, #tpu.memory_space<vmem>>, vector<8x1xf32>,
    } else {
    }
    return
  }
  func.func @transform_0(%arg0: i32, %arg1: i32, %arg2: i32) -> (i32, i32) {
    %c0_i32 = arith.constant 0 : i32
    return %arg0, %arg2 : i32, i32
  }
  func.func @transform_1(%arg0: i32, %arg1: i32, %arg2: i32) -> (i32, i32) {
    %c0_i32 = arith.constant 0 : i32
    return %arg2, %arg1 : i32, i32
  }
  func.func @transform_2(%arg0: i32, %arg1: i32, %arg2: i32) -> (i32, i32) {
    %c0_i32 = arith.constant 0 : i32
    %c0_i32_0 = arith.constant 0 : i32
    return %c0_i32, %arg1 : i32, i32
  }
  func.func @transform_3(%arg0: i32, %arg1: i32, %arg2: i32) -> (i32, i32) {
    %c0_i32 = arith.constant 0 : i32
    %c0_i32_0 = arith.constant 0 : i32
    return %arg0, %c0_i32 : i32, i32
  }
  func.func @transform_4(%arg0: i32, %arg1: i32, %arg2: i32) -> (i32, i32) {
    %c0_i32 = arith.constant 0 : i32
    %c0_i32_0 = arith.constant 0 : i32
    return %arg0, %c0_i32 : i32, i32
  }
}

</mosaic_0001>

<llo_original>
// kernel: tpu_custom_call.1
$region0: #{tpu_custom_call.1}
  #allocation0 [shape = 'u32[]', space=smem, size = 0x4, offset = 0x4, fixed_abs, tag = 'smem constant byte address 0x4 - core index']
  #allocation1 [shape = 'u32[72,128]{1,0:T(1,128)}', space=vmem, size = 0x9000, scoped, tag = 'internal scratch']
  #allocation2 [shape = 'f32[8,128]{1,0:T(8,128)}', space=vmem, size = 0x1000, scoped, tag = 'scratch operand']
  #allocation3 [shape = 'f32[8,128]{1,0:T(8,128)}', space=vmem, size = 0x1000, scoped, tag = 'scratch operand']
  #allocation4 [shape = 'f32[8,1]{1,0:T(8,128)}', space=vmem, size = 0x1000, scoped, tag = 'scratch operand']
  #allocation5 [shape = 'f32[8,1]{1,0:T(8,128)}', space=vmem, size = 0x1000, scoped, tag = 'scratch operand']
  %s0 = inlined_call_operand.vmem [shape: f32[8,128], index: 0, kind: input, shape index: {}]
  %s1 = inlined_call_operand.hbm [shape: bf16[128,128], index: 1, kind: input, shape index: {}]
  %s2 = inlined_call_operand.vmem [shape: f32[1,128], index: 2, kind: input, shape index: {}]
  %s3 = inlined_call_operand.vmem [shape: s32[8,1], index: 3, kind: input, shape index: {}]
  %s4 = inlined_call_operand.vmem [shape: f32[8,1], index: 4, kind: output, shape index: {}]
  %s5 = sld [smem:[#allocation0]]
  $region46: #{tpu_custom_call.1} parent=0
    _
  %s7 = ssub.s32 1, %s5
  %s8 = scalar_select 0, %s7, %s5
  $region1: #{tpu_custom_call.1} parent=0
    #allocation6 [shape = 'u8[32768]{0}', space=vmem, size = 0x8000, scoped, tag = 'input window, operand 1, single buffered']
    #allocation7 [shape = 's32[1]{0}', space=sflag, size = 0x4, scoped, tag = 'scoped memory for tpu_custom_call.1']
    %9 = vsyncpa [#allocation7], 0
    // Predicated region
    $region2: #{tpu_custom_call.1} parent=1 // pred_check
      _
    $region3: #{tpu_custom_call.1} parent=1 // pred_check_branch
      %11 = sbr.rel (0) target = $region5
    $region4: #{tpu_custom_call.1} parent=1 // pred_region
      _
    $region5: #{tpu_custom_call.1} parent=1 // pred_fallthru
      _
    // Predicated region
    $region6: #{tpu_custom_call.1} parent=1 // pred_check
      _
    $region7: #{tpu_custom_call.1} parent=1 // pred_check_branch
      %13 = sbr.rel (0) target = $region9
    $region8: #{tpu_custom_call.1} parent=1 // pred_region
      %15 = vsyncadd [#allocation7], 0
      %s16 = sshll.u32 %s1, 4
      %s17 = int_to_ptr.hbm [resolvable:$true] %s16
      %s18 = sshll.u32 [#allocation6], 4
      %s19 = int_to_ptr.vmem [resolvable:$true] %s18
      %24 = dma.hbm_to_vmem [thread:$0]  %s17, 1024, %s19, [#allocation7], 64, 64, 4
    $region9: #{tpu_custom_call.1} parent=1 // pred_fallthru
      _
    // Predicated region
    $region10: #{tpu_custom_call.1} parent=1 // pred_check
      _
    $region11: #{tpu_custom_call.1} parent=1 // pred_check_branch
      %26 = sbr.rel (0) target = $region13
    $region12: #{tpu_custom_call.1} parent=1 // pred_region
      _
    $region13: #{tpu_custom_call.1} parent=1 // pred_fallthru
      _
    // Predicated region
    $region14: #{tpu_custom_call.1} parent=1 // pred_check
      _
    $region15: #{tpu_custom_call.1} parent=1 // pred_check_branch
      %28 = sbr.rel (0) target = $region17
    $region16: #{tpu_custom_call.1} parent=1 // pred_region
      _
    $region17: #{tpu_custom_call.1} parent=1 // pred_fallthru
      _
    // Predicated region
    $region18: #{tpu_custom_call.1} parent=1 // pred_check
      _
    $region19: #{tpu_custom_call.1} parent=1 // pred_check_branch
      %30 = sbr.rel (0) target = $region21
    $region20: #{tpu_custom_call.1} parent=1 // pred_region
      %32 = dma.done [#allocation7], 1024
    $region21: #{tpu_custom_call.1} parent=1 // pred_fallthru
      _
    %p33 = scmp.eq.s32.totalorder 0, 0
    %p34 = scmp.eq.s32.totalorder 0, 0
    %p35 = pnand %p33, %p34
    %p36 = pneg %p35
    // Predicated region
    $region22: #{tpu_custom_call.1} parent=1 // pred_check
      _
    $region23: #{tpu_custom_call.1} parent=1 // pred_check_branch
      %38 = sbr.rel (%p35) target = $region25
    $region24: #{tpu_custom_call.1} parent=1 // pred_region
      %vm39 = vcmask 7168
      %40 = vst.msk [vmem:[#allocation4] sm:$0xff] %vm39, 0.0
      %41 = vst.msk [vmem:[#allocation5] sm:$0xff] %vm39, 0.0
    $region25: #{tpu_custom_call.1} parent=1 // pred_fallthru
      _
    // Predicated region
    $region26: #{tpu_custom_call.1} parent=1 // pred_check
      %p42 = pneg %p34
    $region27: #{tpu_custom_call.1} parent=1 // pred_check_branch
      %44 = sbr.rel (%p42) target = $region29
    $region28: #{tpu_custom_call.1} parent=1 // pred_region
      %45 = vst [vmem:[#allocation2] sm:$0xff] 0.0
      %46 = vst [vmem:[#allocation3] sm:$0xff] 0.0
    $region29: #{tpu_custom_call.1} parent=1 // pred_fallthru
      _
    %v47 = vld [vmem:[#allocation6] sm:$0xf]
    %v48 = vld [vmem:[#allocation6 + $0x4] sm:$0xf]
    %v49 = vld [vmem:[#allocation6 + $0x8] sm:$0xf]
    %v50 = vld [vmem:[#allocation6 + $0xc] sm:$0xf]
    %v51 = vld [vmem:[#allocation6 + $0x10] sm:$0xf]
    %v52 = vld [vmem:[#allocation6 + $0x14] sm:$0xf]
    %v53 = vld [vmem:[#allocation6 + $0x18] sm:$0xf]
    %v54 = vld [vmem:[#allocation6 + $0x1c] sm:$0xf]
    %v55 = vld [vmem:[#allocation6 + $0x20] sm:$0xf]
    %v56 = vld [vmem:[#allocation6 + $0x24] sm:$0xf]
    %v57 = vld [vmem:[#allocation6 + $0x28] sm:$0xf]
    %v58 = vld [vmem:[#allocation6 + $0x2c] sm:$0xf]
    %v59 = vld [vmem:[#allocation6 + $0x30] sm:$0xf]
    %v60 = vld [vmem:[#allocation6 + $0x34] sm:$0xf]
    %v61 = vld [vmem:[#allocation6 + $0x38] sm:$0xf]
    %v62 = vld [vmem:[#allocation6 + $0x3c] sm:$0xf]
    %v63 = vunpack.c.l.bf16 %v47
    %v64 = vunpack.c.l.bf16 %v48
    %v65 = vunpack.c.l.bf16 %v49
    %v66 = vunpack.c.l.bf16 %v50
    %v67 = vunpack.c.l.bf16 %v51
    %v68 = vunpack.c.l.bf16 %v52
    %v69 = vunpack.c.l.bf16 %v53
    %v70 = vunpack.c.l.bf16 %v54
    %v71 = vunpack.c.l.bf16 %v55
    %v72 = vunpack.c.l.bf16 %v56
    %v73 = vunpack.c.l.bf16 %v57
    %v74 = vunpack.c.l.bf16 %v58
    %v75 = vunpack.c.l.bf16 %v59
    %v76 = vunpack.c.l.bf16 %v60
    %v77 = vunpack.c.l.bf16 %v61
    %v78 = vunpack.c.l.bf16 %v62
    %v79 = vld [vmem:[%s0] sm:$0xff]
    %v80 = vld [vmem:[#allocation2] sm:$0xff]
    %81 = vmatpush.msra.mxu0 %v78
    %82 = vmatpush.msra.mxu0 %v77
    %83 = vmatpush.msra.mxu0 %v76
    %84 = vmatpush.msra.mxu0 %v75
    %85 = vmatpush.msra.mxu0 %v74
    %86 = vmatpush.msra.mxu0 %v73
    %87 = vmatpush.msra.mxu0 %v72
    %88 = vmatpush.msra.mxu0 %v71
    %89 = vmatpush.msra.mxu0 %v70
    %90 = vmatpush.msra.mxu0 %v69
    %91 = vmatpush.msra.mxu0 %v68
    %92 = vmatpush.msra.mxu0 %v67
    %93 = vmatpush.msra.mxu0 %v66
    %94 = vmatpush.msra.mxu0 %v65
    %95 = vmatpush.msra.mxu0 %v64
    %96 = vmatpush.msra.mxu0 %v63
    %97 = vmatmul.f32.gmra.mxu0 %v79
    %v98 = vpop.f32.mrf.mxu0
    %v99 = vadd.f32 0.0, %v98
    %100 = vdwg.mxu0
    %v101 = vadd.f32 %v80, %v99
    %102 = vst [vmem:[#allocation2] sm:$0xff] %v101
    %v103 = vld [vmem:[%s3] sm:$0xff]
    %v104 = vlaneseq
    %v105 = vand.u32 %v104, 127
    %s106 = smul.u32 0, 128
    %v107 = vstv %s106
    %v108 = vadd.s32 %v105, %v107
    %109 = vset.pattern.permute.xlu0 0
    %110 = vperm.xlu0 %109, %v103
    %v111 = vpop.permute.xlu0 %110
    %vm112 = vcmp.eq.s32.totalorder %v108, %v111
    %v113 = vsel %vm112, 1, 0
    %v114 = vcvt.s32.f32 %v113
    %v115 = vld [vmem:[#allocation3] sm:$0xff]
    %116 = vmatpush.msra.mxu0 %v78
    %117 = vmatpush.msra.mxu0 %v77
    %118 = vmatpush.msra.mxu0 %v76
    %119 = vmatpush.msra.mxu0 %v75
    %120 = vmatpush.msra.mxu0 %v74
    %121 = vmatpush.msra.mxu0 %v73
    %122 = vmatpush.msra.mxu0 %v72
    %123 = vmatpush.msra.mxu0 %v71
    %124 = vmatpush.msra.mxu0 %v70
    %125 = vmatpush.msra.mxu0 %v69
    %126 = vmatpush.msra.mxu0 %v68
    %127 = vmatpush.msra.mxu0 %v67
    %128 = vmatpush.msra.mxu0 %v66
    %129 = vmatpush.msra.mxu0 %v65
    %130 = vmatpush.msra.mxu0 %v64
    %131 = vmatpush.msra.mxu0 %v63
    %132 = vmatmul.f32.gmra.mxu0 %v114
    %v133 = vpop.f32.mrf.mxu0
    %v134 = vadd.f32 0.0, %v133
    %135 = vdwg.mxu0
    %v136 = vadd.f32 %v115, %v134
    %137 = vst [vmem:[#allocation3] sm:$0xff] %v136
    // Predicated region
    $region30: #{tpu_custom_call.1} parent=1 // pred_check
      %p138 = pneg %p34
    $region31: #{tpu_custom_call.1} parent=1 // pred_check_branch
      %140 = sbr.rel (%p138) target = $region33
    $region32: #{tpu_custom_call.1} parent=1 // pred_region
      %v141 = vld [vmem:[#allocation2] sm:$0xff]
      %v142 = vld [vmem:[#allocation3] sm:$0xff]
      %vm143 = vcmp.gt.f32.partialorder %v142, 0.5
      %v144 = vsel %vm143, %v141, 1.0
      %v145 = vlog2.pop %v144
      %v146 = vmul.f32 %v145, 0.6931472
      %v147 = vld [vmem:[#allocation4] sm:$0xff]
      %v148 = vmul.f32 %v142, %v146
      %149 = vadd.xlane.f32.xlu0 %v148
      %v150 = vpop.xlane.xlu0 %149
      %v151 = vadd.f32 %v147, %v150
      %vm152 = vcmask 7168
      %153 = vst.msk [vmem:[#allocation4] sm:$0xff] %vm152, %v151
    $region33: #{tpu_custom_call.1} parent=1 // pred_fallthru
      _
    // Predicated region
    $region34: #{tpu_custom_call.1} parent=1 // pred_check
      _
    $region35: #{tpu_custom_call.1} parent=1 // pred_check_branch
      %155 = sbr.rel (%p35) target = $region37
    $region36: #{tpu_custom_call.1} parent=1 // pred_region
      %v156 = vld [vmem:[#allocation4] sm:$0xff]
      %v157 = vsub.f32 0.0, %v156
      %vm158 = vcmask 7168
      %159 = vst.msk [vmem:[%s4] sm:$0xff] %vm158, %v157
    $region37: #{tpu_custom_call.1} parent=1 // pred_fallthru
      _
    // Predicated region
    $region38: #{tpu_custom_call.1} parent=1 // pred_check
      _
    $region39: #{tpu_custom_call.1} parent=1 // pred_check_branch
      %161 = sbr.rel (0) target = $region41
    $region40: #{tpu_custom_call.1} parent=1 // pred_region
      _
    $region41: #{tpu_custom_call.1} parent=1 // pred_fallthru
      _
    // Predicated region
    $region42: #{tpu_custom_call.1} parent=1 // pred_check
      _
    $region43: #{tpu_custom_call.1} parent=1 // pred_check_branch
      %163 = sbr.rel (0) target = $region45
    $region44: #{tpu_custom_call.1} parent=1 // pred_region
      _
    $region45: #{tpu_custom_call.1} parent=1 // pred_fallthru
      _
    %164 = vsyncpa [#allocation7], 1

</llo_original>
